<compile_context>
chip_gen: v5e
topology: v5e:2x2
jax: 0.10.0
libtpu: 0.0.40
codegen_flags: <defaults>
</compile_context>

<pallas_src>
import numpy as np
import jax
import jax.numpy as jnp
from jax.experimental import pallas as pl
from jax.experimental.pallas import tpu as pltpu


def _round_up(v, m):
    return ((v + m - 1) // m) * m


# ---------------------------------------------------------------------------
# Kernel 1: GCN layer + fused edge-head projections (per node).
#   grid = (row tiles i, contraction tiles k); k is the reduction axis.
#   h      = leaky_relu(A_norm @ (X @ W1) + b1)
#   p_dst  = h @ W2[:H]   (lane-padded to 128, stored bf16)
#   p_src  = h @ W2[H:]   (lane-padded to 128, stored bf16)
# ---------------------------------------------------------------------------
def node_kernel(a_ref, x_ref, w1_ref, b1_ref, w2y_ref, w2z_ref,
                pd_ref, ps_ref, acc_ref):
    k = pl.program_id(1)

    @pl.when(k == 0)
    def _():
        acc_ref[...] = jnp.zeros_like(acc_ref)

    # X @ W1 for this contraction tile; C_in == 1 is a pure VPU broadcast
    # (a K=1 matmul would waste an MXU push for one bundle of VPU work).
    if x_ref.shape[1] == 1:
        xw = x_ref[...] * w1_ref[...]                       # [tk,1]*[1,H] -> [tk,H]
    else:
        xw = jnp.dot(x_ref[...], w1_ref[...],
                     preferred_element_type=jnp.float32)    # [tk,H]

    acc_ref[...] += jnp.dot(a_ref[...], xw,
                            preferred_element_type=jnp.float32)   # [tm,H]

    @pl.when(k == pl.num_programs(1) - 1)
    def _():
        h = acc_ref[...] + b1_ref[...]
        h = jnp.where(h > 0, h, 0.01 * h)                   # leaky_relu, f32 VPU
        pd_ref[...] = jnp.dot(h, w2y_ref[...],
                              preferred_element_type=jnp.float32).astype(pd_ref.dtype)
        ps_ref[...] = jnp.dot(h, w2z_ref[...],
                              preferred_element_type=jnp.float32).astype(ps_ref.dtype)


# ---------------------------------------------------------------------------
# Kernel 2: edge gather + add via one-hot matmuls on the bf16 MXU path.
#   out[e] = p_dst[dst[e]] + p_src[src[e]] + b2     (lane-padded to 128)
# ---------------------------------------------------------------------------
def edge_kernel(dst_ref, src_ref, pd_ref, ps_ref, b2_ref, out_ref):
    n = pd_ref.shape[0]
    te = dst_ref.shape[0]
    iota = jax.lax.broadcasted_iota(jnp.int32, (te, n), 1)
    oh_d = (dst_ref[...] == iota).astype(jnp.bfloat16)       # 0/1 exact in bf16
    oh_s = (src_ref[...] == iota).astype(jnp.bfloat16)
    acc = jnp.dot(oh_d, pd_ref[...], preferred_element_type=jnp.float32)
    acc = acc + jnp.dot(oh_s, ps_ref[...], preferred_element_type=jnp.float32)
    out_ref[...] = acc + b2_ref[...]                          # [TE,128] lane-dense


def net_conv_forward(x, edge_index, w1, b1, w2, b2):
    """x: [N, C_in] f32, edge_index: [2, E] int32. Returns (x2, x2), x2: [E, 2]."""
    n_nodes, c_in = x.shape
    n_edges = edge_index.shape[1]
    hidden = w1.shape[1]
    out_dim = w2.shape[1]
    lanes = 128

    src = edge_index[0].astype(jnp.int32)
    dst = edge_index[1].astype(jnp.int32)

    # ---- glue: dense symmetric-normalized adjacency (PyG gcn_norm) --------
    # Duplicate edges are summed; self-loops added only where missing.
    tm = min(_round_up(n_nodes, 8), 256)      # tile caps keep 2x-buffered f32
    tk = tm                                   # tiles far below v7x's 64 MiB VMEM
    n_pad = _round_up(n_nodes, tm)

    adj = jnp.zeros((n_pad, n_pad), jnp.float32).at[dst, src].add(1.0)
    diag = jnp.diagonal(adj)[:n_nodes]
    add_loop = jnp.where(diag == 0.0, 1.0, 0.0)
    adj = adj.at[jnp.arange(n_nodes), jnp.arange(n_nodes)].add(add_loop)
    deg = jnp.sum(adj, axis=1)
    dinv = jnp.where(deg > 0, jax.lax.rsqrt(deg), 0.0)
    a_norm = dinv[:, None] * adj * dinv[None, :]              # [n_pad, n_pad] f32

    x_pad = jnp.pad(x.astype(jnp.float32), ((0, n_pad - n_nodes), (0, 0)))
    b1_row = b1.reshape(1, hidden).astype(jnp.float32)

    # Fused edge head: out = h[dst] @ W2[:H] + h[src] @ W2[H:] + b2.
    # Lane-pad projection weights / bias to 128 -> all stores are unmasked.
    w2y = jnp.pad(w2[:hidden].astype(jnp.float32), ((0, 0), (0, lanes - out_dim)))
    w2z = jnp.pad(w2[hidden:].astype(jnp.float32), ((0, 0), (0, lanes - out_dim)))
    b2_pad = jnp.pad(b2.reshape(1, out_dim).astype(jnp.float32),
                     ((0, 0), (0, lanes - out_dim)))

    # ---- kernel 1: per-node projections ------------------------------------
    p_dst, p_src = pl.pallas_call(
        node_kernel,
        out_shape=(jax.ShapeDtypeStruct((n_pad, lanes), jnp.bfloat16),
                   jax.ShapeDtypeStruct((n_pad, lanes), jnp.bfloat16)),
        grid=(n_pad // tm, n_pad // tk),
        in_specs=[
            pl.BlockSpec((tm, tk), lambda i, k: (i, k)),          # a_norm
            pl.BlockSpec((tk, c_in), lambda i, k: (k, 0)),        # x
            pl.BlockSpec((c_in, hidden), lambda i, k: (0, 0)),    # w1
            pl.BlockSpec((1, hidden), lambda i, k: (0, 0)),       # b1
            pl.BlockSpec((hidden, lanes), lambda i, k: (0, 0)),   # w2 (dst half)
            pl.BlockSpec((hidden, lanes), lambda i, k: (0, 0)),   # w2 (src half)
        ],
        out_specs=(pl.BlockSpec((tm, lanes), lambda i, k: (i, 0)),
                   pl.BlockSpec((tm, lanes), lambda i, k: (i, 0))),
        scratch_shapes=[pltpu.VMEM((tm, hidden), jnp.float32)],
        compiler_params=pltpu.CompilerParams(
            dimension_semantics=("parallel", "arbitrary")),
    )(a_norm, x_pad, w1.astype(jnp.float32), b1_row, w2y, w2z)

    # ---- kernel 2: edge gather + add ---------------------------------------
    te = min(_round_up(n_edges, 8), 256)
    e_pad = _round_up(n_edges, te)
    dst_col = jnp.pad(dst, (0, e_pad - n_edges)).reshape(e_pad, 1)
    src_col = jnp.pad(src, (0, e_pad - n_edges)).reshape(e_pad, 1)

    out_pad = pl.pallas_call(
        edge_kernel,
        out_shape=jax.ShapeDtypeStruct((e_pad, lanes), jnp.float32),
        grid=(e_pad // te,),
        in_specs=[
            pl.BlockSpec((te, 1), lambda e: (e, 0)),              # dst indices
            pl.BlockSpec((te, 1), lambda e: (e, 0)),              # src indices
            pl.BlockSpec((n_pad, lanes), lambda e: (0, 0)),       # p_dst (bf16)
            pl.BlockSpec((n_pad, lanes), lambda e: (0, 0)),       # p_src (bf16)
            pl.BlockSpec((1, lanes), lambda e: (0, 0)),           # b2
        ],
        out_specs=pl.BlockSpec((te, lanes), lambda e: (e, 0)),
        compiler_params=pltpu.CompilerParams(
            dimension_semantics=("parallel",)),
    )(dst_col, src_col, p_dst, p_src, b2_pad)

    x2 = out_pad[:n_edges, :out_dim]
    return x2, x2


def reference_forward(x, edge_index, w1, b1, w2, b2):
    n_nodes = x.shape[0]
    src, dst = edge_index[0], edge_index[1]
    adj = jnp.zeros((n_nodes, n_nodes), jnp.float32).at[dst, src].add(1.0)
    diag = jnp.diagonal(adj)
    adj = adj + jnp.diag(jnp.where(diag == 0.0, 1.0, 0.0))
    deg = jnp.sum(adj, axis=1)
    dinv = jnp.where(deg > 0, jax.lax.rsqrt(deg), 0.0)
    a_norm = dinv[:, None] * adj * dinv[None, :]
    h = a_norm @ (x @ w1) + b1
    h = jnp.where(h > 0, h, 0.01 * h)
    z = h[src, :]
    y = h[dst, :]
    cat = jnp.concatenate([y, z], axis=1)
    return cat @ w2 + b2


if __name__ == "__main__":
    key = jax.random.PRNGKey(0)
    k_x, k_w1, k_b1, k_w2, k_b2 = jax.random.split(key, 5)

    # Small synthetic graph: N=8 nodes, input_size=1 features, undirected ring
    n_nodes, input_size = 8, 1
    x = jax.random.normal(k_x, (n_nodes, input_size), dtype=jnp.float32)

    fwd = np.stack([np.arange(n_nodes), (np.arange(n_nodes) + 1) % n_nodes])
    edge_index = jnp.asarray(np.concatenate([fwd, fwd[::-1]], axis=1),
                             dtype=jnp.int32)                       # [2, 16]

    # Deterministic parameter init (synthetic; shapes from Net_Conv.__init__)
    w1 = jax.random.normal(k_w1, (input_size, 5), dtype=jnp.float32) * 0.5  # GCNConv weight
    b1 = jax.random.normal(k_b1, (5,), dtype=jnp.float32) * 0.1             # GCNConv bias
    w2 = jax.random.normal(k_w2, (10, 2), dtype=jnp.float32) * 0.5          # linear2 weight^T
    b2 = jax.random.normal(k_b2, (2,), dtype=jnp.float32) * 0.1             # linear2 bias
    # TODO(synk): linear1 is declared in __init__ but never used in forward -> omitted.

    out, out2 = net_conv_forward(x, edge_index, w1, b1, w2, b2)
    out = jax.block_until_ready(out)

    ref = reference_forward(x, edge_index, w1, b1, w2, b2)
    # p_dst/p_src are stored bf16 to hit the bf16 MXU gather path, so the only
    # deviation from the f32 reference is ~2^-9 relative rounding of the
    # per-node projections (a_norm itself is kept f32 per review concern #3).
    np.testing.assert_allclose(np.asarray(out), np.asarray(ref), rtol=1e-2, atol=1e-2)
    np.testing.assert_allclose(np.asarray(out2), np.asarray(out))

    print("KERNEL_OK")
</pallas_src>

<mosaic_0001>
module attributes {stable_mosaic.version = 11 : i64} {
  func.func @node_kernel(%arg0: i32, %arg1: i32, %arg2: memref<8x8xf32, #tpu.memory_space<vmem>>, %arg3: memref<8x1xf32, #tpu.memory_space<vmem>>, %arg4: memref<1x5xf32, #tpu.memory_space<vmem>>, %arg5: memref<1x5xf32, #tpu.memory_space<vmem>>, %arg6: memref<5x128xf32, #tpu.memory_space<vmem>>, %arg7: memref<5x128xf32, #tpu.memory_space<vmem>>, %arg8: memref<8x128xbf16, #tpu.memory_space<vmem>>, %arg9: memref<8x128xbf16, #tpu.memory_space<vmem>>, %arg10: memref<8x5xf32, #tpu.memory_space<vmem>>) attributes {dimension_semantics = [#tpu.dimension_semantics<parallel>, #tpu.dimension_semantics<arbitrary>], iteration_bounds = array<i64: 1, 1>, scalar_prefetch = 0 : i64, scratch_operands = 1 : i64, tpu.core_type = #tpu.core_type<tc>, window_params = [{transform_indices = @transform_0, window_bounds = array<i64: 8, 8>}, {transform_indices = @transform_1, window_bounds = array<i64: 8, 1>}, {pipeline_mode = #tpu.pipeline_mode<synchronous>, transform_indices = @transform_2, window_bounds = array<i64: 1, 5>}, {pipeline_mode = #tpu.pipeline_mode<synchronous>, transform_indices = @transform_3, window_bounds = array<i64: 1, 5>}, {pipeline_mode = #tpu.pipeline_mode<synchronous>, transform_indices = @transform_4, window_bounds = array<i64: 5, 128>}, {pipeline_mode = #tpu.pipeline_mode<synchronous>, transform_indices = @transform_5, window_bounds = array<i64: 5, 128>}, {transform_indices = @transform_6, window_bounds = array<i64: 8, 128>}, {transform_indices = @transform_7, window_bounds = array<i64: 8, 128>}]} {
    %c0_i32 = arith.constant 0 : i32
    %0 = arith.cmpi eq, %arg1, %c0_i32 : i32
    %1 = arith.extui %0 : i1 to i32
    %c0_i32_0 = arith.constant 0 : i32
    %2 = arith.cmpi ne, %1, %c0_i32_0 : i32
    scf.if %2 {
      %cst_12 = arith.constant 0.000000e+00 : f32
      %16 = vector.broadcast %cst_12 : f32 to vector<8x5xf32>
      %c0_13 = arith.constant 0 : index
      %c0_14 = arith.constant 0 : index
      %17 = vector.load %arg10[%c0_13, %c0_14] : memref<8x5xf32, #tpu.memory_space<vmem>>, vector<8x5xf32>
      tpu.vector_store %arg10[%c0_13, %c0_14], %16 {strides = array<i32>} : memref<8x5xf32, #tpu.memory_space<vmem>>, vector<8x5xf32>,
    } else {
    }
    %c0 = arith.constant 0 : index
    %c0_1 = arith.constant 0 : index
    %3 = vector.load %arg3[%c0, %c0_1] : memref<8x1xf32, #tpu.memory_space<vmem>>, vector<8x1xf32>
    %c0_2 = arith.constant 0 : index
    %c0_3 = arith.constant 0 : index
    %4 = vector.load %arg4[%c0_2, %c0_3] : memref<1x5xf32, #tpu.memory_space<vmem>>, vector<1x5xf32>
    %5 = vector.broadcast %3 : vector<8x1xf32> to vector<8x5xf32>
    %6 = vector.broadcast %4 : vector<1x5xf32> to vector<8x5xf32>
    %7 = arith.mulf %5, %6 : vector<8x5xf32>
    %c0_4 = arith.constant 0 : index
    %c0_5 = arith.constant 0 : index
    %8 = vector.load %arg10[%c0_4, %c0_5] : memref<8x5xf32, #tpu.memory_space<vmem>>, vector<8x5xf32>
    %c0_6 = arith.constant 0 : index
    %c0_7 = arith.constant 0 : index
    %9 = vector.load %arg2[%c0_6, %c0_7] : memref<8x8xf32, #tpu.memory_space<vmem>>, vector<8x8xf32>
    %cst = arith.constant dense<0.000000e+00> : vector<8x5xf32>
    %10 = tpu.matmul %9, %7, %cst {dimension_numbers = #tpu.dot_dimension_numbers<[1], [0], [0], [1], [0, 0, 1, 1], [], []>} : vector<8x8xf32>, vector<8x5xf32>, vector<8x5xf32> -> vector<8x5xf32>
    %11 = arith.addf %8, %10 : vector<8x5xf32>
    %c0_8 = arith.constant 0 : index
    %c0_9 = arith.constant 0 : index
    %12 = vector.load %arg10[%c0_8, %c0_9] : memref<8x5xf32, #tpu.memory_space<vmem>>, vector<8x5xf32>
    tpu.vector_store %arg10[%c0_8, %c0_9], %11 {strides = array<i32>} : memref<8x5xf32, #tpu.memory_space<vmem>>, vector<8x5xf32>,
    %c0_i32_10 = arith.constant 0 : i32
    %13 = arith.cmpi eq, %arg1, %c0_i32_10 : i32
    %14 = arith.extui %13 : i1 to i32
    %c0_i32_11 = arith.constant 0 : i32
    %15 = arith.cmpi ne, %14, %c0_i32_11 : i32
    scf.if %15 {
      %c0_12 = arith.constant 0 : index
      %c0_13 = arith.constant 0 : index
      %16 = vector.load %arg10[%c0_12, %c0_13] : memref<8x5xf32, #tpu.memory_space<vmem>>, vector<8x5xf32>
      %c0_14 = arith.constant 0 : index
      %c0_15 = arith.constant 0 : index
      %17 = vector.load %arg5[%c0_14, %c0_15] : memref<1x5xf32, #tpu.memory_space<vmem>>, vector<1x5xf32>
      %18 = vector.broadcast %17 : vector<1x5xf32> to vector<8x5xf32>
      %19 = arith.addf %16, %18 : vector<8x5xf32>
      %cst_16 = arith.constant 0.000000e+00 : f32
      %20 = vector.broadcast %cst_16 : f32 to vector<8x5xf32>
      %21 = arith.cmpf ogt, %19, %20 : vector<8x5xf32>
      %cst_17 = arith.constant 0.00999999977 : f32
      %22 = vector.broadcast %cst_17 : f32 to vector<8x5xf32>
      %23 = arith.mulf %22, %19 : vector<8x5xf32>
      %24 = arith.select %21, %19, %23 : vector<8x5xi1>, vector<8x5xf32>
      %c0_18 = arith.constant 0 : index
      %c0_19 = arith.constant 0 : index
      %25 = vector.load %arg6[%c0_18, %c0_19] : memref<5x128xf32, #tpu.memory_space<vmem>>, vector<5x128xf32>
      %cst_20 = arith.constant dense<0.000000e+00> : vector<8x128xf32>
      %26 = tpu.matmul %24, %25, %cst_20 {dimension_numbers = #tpu.dot_dimension_numbers<[1], [0], [0], [1], [0, 0, 1, 1], [], []>} : vector<8x5xf32>, vector<5x128xf32>, vector<8x128xf32> -> vector<8x128xf32>
      %27 = arith.truncf %26 : vector<8x128xf32> to vector<8x128xbf16>
      %c0_21 = arith.constant 0 : index
      %c0_22 = arith.constant 0 : index
      %28 = vector.load %arg8[%c0_21, %c0_22] : memref<8x128xbf16, #tpu.memory_space<vmem>>, vector<8x128xbf16>
      tpu.vector_store %arg8[%c0_21, %c0_22], %27 {strides = array<i32>} : memref<8x128xbf16, #tpu.memory_space<vmem>>, vector<8x128xbf16>,
      %c0_23 = arith.constant 0 : index
      %c0_24 = arith.constant 0 : index
      %29 = vector.load %arg7[%c0_23, %c0_24] : memref<5x128xf32, #tpu.memory_space<vmem>>, vector<5x128xf32>
      %cst_25 = arith.constant dense<0.000000e+00> : vector<8x128xf32>
      %30 = tpu.matmul %24, %29, %cst_25 {dimension_numbers = #tpu.dot_dimension_numbers<[1], [0], [0], [1], [0, 0, 1, 1], [], []>} : vector<8x5xf32>, vector<5x128xf32>, vector<8x128xf32> -> vector<8x128xf32>
      %31 = arith.truncf %30 : vector<8x128xf32> to vector<8x128xbf16>
      %c0_26 = arith.constant 0 : index
      %c0_27 = arith.constant 0 : index
      %32 = vector.load %arg9[%c0_26, %c0_27] : memref<8x128xbf16, #tpu.memory_space<vmem>>, vector<8x128xbf16>
      tpu.vector_store %arg9[%c0_26, %c0_27], %31 {strides = array<i32>} : memref<8x128xbf16, #tpu.memory_space<vmem>>, vector<8x128xbf16>,
    } else {
    }
    return
  }
  func.func @transform_0(%arg0: i32, %arg1: i32) -> (i32, i32) {
    %c0_i32 = arith.constant 0 : i32
    return %arg0, %arg1 : i32, i32
  }
  func.func @transform_1(%arg0: i32, %arg1: i32) -> (i32, i32) {
    %c0_i32 = arith.constant 0 : i32
    %c0_i32_0 = arith.constant 0 : i32
    return %arg1, %c0_i32 : i32, i32
  }
  func.func @transform_2(%arg0: i32, %arg1: i32) -> (i32, i32) {
    %c0_i32 = arith.constant 0 : i32
    %c0_i32_0 = arith.constant 0 : i32
    %c0_i32_1 = arith.constant 0 : i32
    return %c0_i32, %c0_i32_0 : i32, i32
  }
  func.func @transform_3(%arg0: i32, %arg1: i32) -> (i32, i32) {
    %c0_i32 = arith.constant 0 : i32
    %c0_i32_0 = arith.constant 0 : i32
    %c0_i32_1 = arith.constant 0 : i32
    return %c0_i32, %c0_i32_0 : i32, i32
  }
  func.func @transform_4(%arg0: i32, %arg1: i32) -> (i32, i32) {
    %c0_i32 = arith.constant 0 : i32
    %c0_i32_0 = arith.constant 0 : i32
    %c0_i32_1 = arith.constant 0 : i32
    return %c0_i32, %c0_i32_0 : i32, i32
  }
  func.func @transform_5(%arg0: i32, %arg1: i32) -> (i32, i32) {
    %c0_i32 = arith.constant 0 : i32
    %c0_i32_0 = arith.constant 0 : i32
    %c0_i32_1 = arith.constant 0 : i32
    return %c0_i32, %c0_i32_0 : i32, i32
  }
  func.func @transform_6(%arg0: i32, %arg1: i32) -> (i32, i32) {
    %c0_i32 = arith.constant 0 : i32
    %c0_i32_0 = arith.constant 0 : i32
    return %arg0, %c0_i32 : i32, i32
  }
  func.func @transform_7(%arg0: i32, %arg1: i32) -> (i32, i32) {
    %c0_i32 = arith.constant 0 : i32
    %c0_i32_0 = arith.constant 0 : i32
    return %arg0, %c0_i32 : i32, i32
  }
}

</mosaic_0001>

<llo_original>
// kernel: tpu_custom_call.1
$region0: #{tpu_custom_call.1}
  #allocation0 [shape = 'u32[]', space=smem, size = 0x4, offset = 0x4, fixed_abs, tag = 'smem constant byte address 0x4 - core index']
  #allocation1 [shape = 'u32[72,128]{1,0:T(1,128)}', space=vmem, size = 0x9000, scoped, tag = 'internal scratch']
  #allocation2 [shape = 'f32[8,5]{1,0:T(8,128)}', space=vmem, size = 0x1000, scoped, tag = 'scratch operand']
  %s0 = inlined_call_operand.vmem [shape: f32[8,8], index: 0, kind: input, shape index: {}]
  %s1 = inlined_call_operand.vmem [shape: f32[8,1], index: 1, kind: input, shape index: {}]
  %s2 = inlined_call_operand.vmem [shape: f32[1,5], index: 2, kind: input, shape index: {}]
  %s3 = inlined_call_operand.vmem [shape: f32[1,5], index: 3, kind: input, shape index: {}]
  %s4 = inlined_call_operand.hbm [shape: f32[5,128], index: 4, kind: input, shape index: {}]
  %s5 = inlined_call_operand.hbm [shape: f32[5,128], index: 5, kind: input, shape index: {}]
  %s6 = inlined_call_operand.hbm [shape: bf16[8,128], index: 6, kind: output, shape index: {0}]
  %s7 = inlined_call_operand.hbm [shape: bf16[8,128], index: 7, kind: output, shape index: {1}]
  %8 = xla_tuple %s6, %s7
  %s9 = sld [smem:[#allocation0]]
  $region58: #{tpu_custom_call.1} parent=0
    _
  %s11 = ssub.s32 1, %s9
  %s12 = scalar_select 0, %s11, %s9
  $region1: #{tpu_custom_call.1} parent=0
    #allocation3 [shape = 'u8[4096]{0}', space=vmem, size = 0x1000, scoped, tag = 'input window, operand 4, single buffered']
    #allocation4 [shape = 's32[1]{0}', space=sflag, size = 0x4, scoped, tag = 'scoped memory for tpu_custom_call.1']
    #allocation5 [shape = 's32[1]{0}', space=sflag, size = 0x4, scoped, tag = 'scoped memory for tpu_custom_call.1']
    #allocation6 [shape = 'u8[4096]{0}', space=vmem, size = 0x1000, scoped, tag = 'input window, operand 5, single buffered']
    #allocation7 [shape = 's32[1]{0}', space=sflag, size = 0x4, scoped, tag = 'scoped memory for tpu_custom_call.1']
    #allocation8 [shape = 'u8[2048]{0}', space=vmem, size = 0x800, scoped, tag = 'output window, operand 0, single buffered']
    #allocation9 [shape = 'u8[2048]{0}', space=vmem, size = 0x800, scoped, tag = 'output window, operand 1, single buffered']
    #allocation10 [shape = 's32[1]{0}', space=sflag, size = 0x4, scoped, tag = 'scoped memory for tpu_custom_call.1']
    %13 = vsyncpa [#allocation4], 0
    %14 = vsyncpa [#allocation7], 0
    %15 = vsyncpa [#allocation5], 0
    %16 = vsyncpa [#allocation10], 0
    // Predicated region
    $region2: #{tpu_custom_call.1} parent=1 // pred_check
      _
    $region3: #{tpu_custom_call.1} parent=1 // pred_check_branch
      %18 = sbr.rel (0) target = $region5
    $region4: #{tpu_custom_call.1} parent=1 // pred_region
      _
    $region5: #{tpu_custom_call.1} parent=1 // pred_fallthru
      _
    // Predicated region
    $region6: #{tpu_custom_call.1} parent=1 // pred_check
      _
    $region7: #{tpu_custom_call.1} parent=1 // pred_check_branch
      %20 = sbr.rel (0) target = $region9
    $region8: #{tpu_custom_call.1} parent=1 // pred_region
      _
    $region9: #{tpu_custom_call.1} parent=1 // pred_fallthru
      _
    // Predicated region
    $region10: #{tpu_custom_call.1} parent=1 // pred_check
      _
    $region11: #{tpu_custom_call.1} parent=1 // pred_check_branch
      %22 = sbr.rel (0) target = $region13
    $region12: #{tpu_custom_call.1} parent=1 // pred_region
      _
    $region13: #{tpu_custom_call.1} parent=1 // pred_fallthru
      _
    // Predicated region
    $region14: #{tpu_custom_call.1} parent=1 // pred_check
      _
    $region15: #{tpu_custom_call.1} parent=1 // pred_check_branch
      %24 = sbr.rel (0) target = $region17
    $region16: #{tpu_custom_call.1} parent=1 // pred_region
      _
    $region17: #{tpu_custom_call.1} parent=1 // pred_fallthru
      _
    // Predicated region
    $region18: #{tpu_custom_call.1} parent=1 // pred_check
      _
    $region19: #{tpu_custom_call.1} parent=1 // pred_check_branch
      %26 = sbr.rel (0) target = $region21
    $region20: #{tpu_custom_call.1} parent=1 // pred_region
      %28 = vsyncadd [#allocation4], 0
      %s30 = sshll.u32 %s4, 4
      %s31 = int_to_ptr.hbm [resolvable:$true] %s30
      %s32 = sshll.u32 [#allocation3], 4
      %s33 = int_to_ptr.vmem [resolvable:$true] %s32
      %35 = dma.hbm_to_vmem [thread:$0]  %s31, 128, %s33, [#allocation4]
    $region21: #{tpu_custom_call.1} parent=1 // pred_fallthru
      _
    // Predicated region
    $region22: #{tpu_custom_call.1} parent=1 // pred_check
      _
    $region23: #{tpu_custom_call.1} parent=1 // pred_check_branch
      %37 = sbr.rel (0) target = $region25
    $region24: #{tpu_custom_call.1} parent=1 // pred_region
      %39 = vsyncadd [#allocation7], 0
      %s41 = sshll.u32 %s5, 4
      %s42 = int_to_ptr.hbm [resolvable:$true] %s41
      %s43 = sshll.u32 [#allocation6], 4
      %s44 = int_to_ptr.vmem [resolvable:$true] %s43
      %46 = dma.hbm_to_vmem [thread:$0]  %s42, 128, %s44, [#allocation7]
    $region25: #{tpu_custom_call.1} parent=1 // pred_fallthru
      _
    // Predicated region
    $region26: #{tpu_custom_call.1} parent=1 // pred_check
      _
    $region27: #{tpu_custom_call.1} parent=1 // pred_check_branch
      %48 = sbr.rel (0) target = $region29
    $region28: #{tpu_custom_call.1} parent=1 // pred_region
      %50 = dma.done [#allocation4], 128
    $region29: #{tpu_custom_call.1} parent=1 // pred_fallthru
      _
    // Predicated region
    $region30: #{tpu_custom_call.1} parent=1 // pred_check
      _
    $region31: #{tpu_custom_call.1} parent=1 // pred_check_branch
      %52 = sbr.rel (0) target = $region33
    $region32: #{tpu_custom_call.1} parent=1 // pred_region
      %54 = dma.done [#allocation7], 128
    $region33: #{tpu_custom_call.1} parent=1 // pred_fallthru
      _
    %p55 = scmp.eq.s32.totalorder 0, 0
    // Predicated region
    $region34: #{tpu_custom_call.1} parent=1 // pred_check
      %p56 = pneg %p55
    $region35: #{tpu_custom_call.1} parent=1 // pred_check_branch
      %58 = sbr.rel (%p56) target = $region37
    $region36: #{tpu_custom_call.1} parent=1 // pred_region
      %vm59 = vcmask 39936
      %60 = vst.msk [vmem:[#allocation2] sm:$0xff] %vm59, 0.0
    $region37: #{tpu_custom_call.1} parent=1 // pred_fallthru
      _
    %v61 = vld [vmem:[%s1] sm:$0xff]
    %v62 = vld [vmem:[%s2] sm:$0x1]
    %64 = vset.pattern.permute.xlu0 0
    %65 = vperm.xlu0 %64, %v61
    %v66 = vpop.permute.xlu0 %65
    %v69 = vperm.slane %v62, 0
    %v71 = vmul.f32 %v66, %v69
    %v72 = vld [vmem:[#allocation2] sm:$0xff]
    %v73 = vld [vmem:[%s0] sm:$0xff]
    %vm74 = vcmask 64512
    %v76 = vsel %vm74, %v73, 0
    %78 = vmatpush.msra.mxu0 0.0
    %79 = vmatpush.msra.mxu0 0.0
    %80 = vmatpush.msra.mxu0 0.0
    %81 = vmatpush.msra.mxu0 0.0
    %82 = vmatpush.msra.mxu0 0.0
    %83 = vmatpush.msra.mxu0 0.0
    %84 = vmatpush.msra.mxu0 0.0
    %85 = vmatpush.msra.mxu0 0.0
    %86 = vmatpush.msra.mxu0 0.0
    %87 = vmatpush.msra.mxu0 0.0
    %88 = vmatpush.msra.mxu0 0.0
    %89 = vmatpush.msra.mxu0 0.0
    %90 = vmatpush.msra.mxu0 0.0
    %91 = vmatpush.msra.mxu0 0.0
    %92 = vmatpush.msra.mxu0 0.0
    %93 = vmatpush.msra.mxu0 %v71
    %94 = vmatmul.f32.gmra.mxu0 %v76
    %v95 = vpop.f32.mrf.mxu0
    %v96 = vadd.f32 0.0, %v95
    %97 = vdwg.mxu0
    %v98 = vadd.f32 %v72, %v96
    %vm99 = vcmask 39936
    %100 = vst.msk [vmem:[#allocation2] sm:$0xff] %vm99, %v98
    // Predicated region
    $region38: #{tpu_custom_call.1} parent=1 // pred_check
      %p101 = pneg %p55
    $region39: #{tpu_custom_call.1} parent=1 // pred_check_branch
      %103 = sbr.rel (%p101) target = $region41
    $region40: #{tpu_custom_call.1} parent=1 // pred_region
      %v104 = vld [vmem:[#allocation2] sm:$0xff]
      %v105 = vld [vmem:[%s3] sm:$0x1]
      %v107 = vperm.slane %v105, 0
      %v109 = vadd.f32 %v104, %v107
      %vm110 = vcmp.gt.f32.partialorder %v109, 0.0
      %v111 = vmul.f32 %v109, 0.01
      %v112 = vsel %vm110, %v109, %v111
      %v113 = vld [vmem:[#allocation3] sm:$0x1f]
      %v115 = vsel %vm99, %v112, 0
      %vm117 = vcmask 1044480
      %v119 = vsel %vm117, %v113, 0
      %121 = vmatpush.msra.mxu0 0.0
      %122 = vmatpush.msra.mxu0 0.0
      %123 = vmatpush.msra.mxu0 0.0
      %124 = vmatpush.msra.mxu0 0.0
      %125 = vmatpush.msra.mxu0 0.0
      %126 = vmatpush.msra.mxu0 0.0
      %127 = vmatpush.msra.mxu0 0.0
      %128 = vmatpush.msra.mxu0 0.0
      %129 = vmatpush.msra.mxu0 0.0
      %130 = vmatpush.msra.mxu0 0.0
      %131 = vmatpush.msra.mxu0 0.0
      %132 = vmatpush.msra.mxu0 0.0
      %133 = vmatpush.msra.mxu0 0.0
      %134 = vmatpush.msra.mxu0 0.0
      %135 = vmatpush.msra.mxu0 0.0
      %136 = vmatpush.msra.mxu0 %v119
      %137 = vmatmul.f32.gmra.mxu0 %v115
      %v138 = vpop.f32.mrf.mxu0
      %v139 = vadd.f32 0.0, %v138
      %140 = vdwg.mxu0
      %v141 = vpack.c.bf16 %v139, %v139
      %142 = vst [vmem:[#allocation8] sm:$0xf] %v141
      %v143 = vld [vmem:[#allocation6] sm:$0x1f]
      %v145 = vsel %vm117, %v143, 0
      %147 = vmatpush.msra.mxu0 0.0
      %148 = vmatpush.msra.mxu0 0.0
      %149 = vmatpush.msra.mxu0 0.0
      %150 = vmatpush.msra.mxu0 0.0
      %151 = vmatpush.msra.mxu0 0.0
      %152 = vmatpush.msra.mxu0 0.0
      %153 = vmatpush.msra.mxu0 0.0
      %154 = vmatpush.msra.mxu0 0.0
      %155 = vmatpush.msra.mxu0 0.0
      %156 = vmatpush.msra.mxu0 0.0
      %157 = vmatpush.msra.mxu0 0.0
      %158 = vmatpush.msra.mxu0 0.0
      %159 = vmatpush.msra.mxu0 0.0
      %160 = vmatpush.msra.mxu0 0.0
      %161 = vmatpush.msra.mxu0 0.0
      %162 = vmatpush.msra.mxu0 %v145
      %163 = vmatmul.f32.gmra.mxu0 %v115
      %v164 = vpop.f32.mrf.mxu0
      %v165 = vadd.f32 0.0, %v164
      %166 = vdwg.mxu0
      %v167 = vpack.c.bf16 %v165, %v165
      %168 = vst [vmem:[#allocation9] sm:$0xf] %v167
    $region41: #{tpu_custom_call.1} parent=1 // pred_fallthru
      _
    // Predicated region
    $region42: #{tpu_custom_call.1} parent=1 // pred_check
      _
    $region43: #{tpu_custom_call.1} parent=1 // pred_check_branch
      %170 = sbr.rel (0) target = $region45
    $region44: #{tpu_custom_call.1} parent=1 // pred_region
      %172 = vsyncadd [#allocation5], 0
      %s174 = sshll.u32 [#allocation8], 4
      %s175 = int_to_ptr.vmem [resolvable:$true] %s174
      %s176 = sshll.u32 %s6, 4
      %s177 = int_to_ptr.hbm [resolvable:$true] %s176
      %179 = dma.vmem_to_hbm [thread:$0]  %s175, 64, %s177, [#allocation5]
    $region45: #{tpu_custom_call.1} parent=1 // pred_fallthru
      _
    // Predicated region
    $region46: #{tpu_custom_call.1} parent=1 // pred_check
      _
    $region47: #{tpu_custom_call.1} parent=1 // pred_check_branch
      %181 = sbr.rel (0) target = $region49
    $region48: #{tpu_custom_call.1} parent=1 // pred_region
      %183 = vsyncadd [#allocation10], 0
      %s185 = sshll.u32 [#allocation9], 4
      %s186 = int_to_ptr.vmem [resolvable:$true] %s185
      %s187 = sshll.u32 %s7, 4
      %s188 = int_to_ptr.hbm [resolvable:$true] %s187
      %190 = dma.vmem_to_hbm [thread:$0]  %s186, 64, %s188, [#allocation10]
    $region49: #{tpu_custom_call.1} parent=1 // pred_fallthru
      _
    // Predicated region
    $region50: #{tpu_custom_call.1} parent=1 // pred_check
      _
    $region51: #{tpu_custom_call.1} parent=1 // pred_check_branch
      %192 = sbr.rel (0) target = $region53
    $region52: #{tpu_custom_call.1} parent=1 // pred_region
      %194 = dma.done [#allocation5], 64
    $region53: #{tpu_custom_call.1} parent=1 // pred_fallthru
      _
    // Predicated region
    $region54: #{tpu_custom_call.1} parent=1 // pred_check
      _
    $region55: #{tpu_custom_call.1} parent=1 // pred_check_branch
      %196 = sbr.rel (0) target = $region57
    $region56: #{tpu_custom_call.1} parent=1 // pred_region
      %198 = dma.done [#allocation10], 64
    $region57: #{tpu_custom_call.1} parent=1 // pred_fallthru
      _
    %199 = vsyncpa [#allocation4], 1
    %200 = vsyncpa [#allocation7], 1
    %201 = vsyncpa [#allocation5], 1
    %202 = vsyncpa [#allocation10], 1

</llo_original>
